<compile_context>
chip_gen: v6e
topology: v6e:2x2x1
jax: 0.10.0
libtpu: 0.0.40
codegen_flags: <defaults>
</compile_context>

<pallas_src>
import functools
import math

import jax
import jax.numpy as jnp
import numpy as np
from jax.experimental import pallas as pl
from jax.experimental.pallas import tpu as pltpu


# --------------------------------------------------------------------------- #
# Kernel A: GroupNorm statistics -> per-(batch, channel) scale / shift
# --------------------------------------------------------------------------- #
def gn_stats_kernel(x_ref, avg_ref, gamma_ref, beta_ref,
                    scale_ref, shift_ref, sum_sc, sq_sc, *, eps):
    t = pl.program_id(1)

    @pl.when(t == 0)
    def _init():
        sum_sc[...] = jnp.zeros(sum_sc.shape, jnp.float32)
        sq_sc[...] = jnp.zeros(sq_sc.shape, jnp.float32)

    x = x_ref[0].astype(jnp.float32)                          # (ts, C)
    sum_sc[...] += jnp.sum(x, axis=0, keepdims=True)          # (1, C)
    sq_sc[...] += jnp.sum(x * x, axis=0, keepdims=True)       # (1, C)

    @pl.when(t == pl.num_programs(1) - 1)
    def _finalize():
        # avg_ref already carries the 1/n_per_group factor on same-group entries.
        mean_c = jnp.dot(sum_sc[...], avg_ref[...],
                         preferred_element_type=jnp.float32)  # (1, C)
        ex2_c = jnp.dot(sq_sc[...], avg_ref[...],
                        preferred_element_type=jnp.float32)   # (1, C)
        var_c = jnp.maximum(ex2_c - mean_c * mean_c, 0.0)
        scale = jax.lax.rsqrt(var_c + eps) * gamma_ref[...]
        scale_ref[0] = scale
        shift_ref[0] = beta_ref[...] - mean_c * scale


# --------------------------------------------------------------------------- #
# Kernel B: normalize + fused QKV projection (tiled over S)
# --------------------------------------------------------------------------- #
def norm_qkv_kernel(x_ref, scale_ref, shift_ref, wqkv_ref, bqkv_ref,
                    q_ref, k_ref, v_ref, *, C):
    x = x_ref[0].astype(jnp.float32)                               # (ts, C)
    h = (x * scale_ref[0] + shift_ref[0]).astype(jnp.bfloat16)     # (ts, C)
    # single fused MXU matmul: bf16 operands, f32 accumulation
    qkv = (jnp.dot(h, wqkv_ref[...], preferred_element_type=jnp.float32)
           + bqkv_ref[...]).astype(jnp.bfloat16)                   # (ts, 3C)
    q_ref[0] = qkv[:, :C]          # 1/sqrt(C) & q bias already folded into Wqkv
    k_ref[0] = qkv[:, C:2 * C]     # k bias dropped (softmax shift-invariance)
    v_ref[0] = qkv[:, 2 * C:]


# --------------------------------------------------------------------------- #
# Kernel C: flash attention + output projection + residual
# --------------------------------------------------------------------------- #
def flash_attn_kernel(q_ref, k_ref, v_ref, x_ref, wot_ref, bo_ref, o_ref,
                      m_sc, l_sc, acc_sc):
    kv = pl.program_id(2)

    @pl.when(kv == 0)
    def _init():
        m_sc[...] = jnp.full(m_sc.shape, -jnp.inf, jnp.float32)
        l_sc[...] = jnp.zeros(l_sc.shape, jnp.float32)
        acc_sc[...] = jnp.zeros(acc_sc.shape, jnp.float32)

    q = q_ref[0]                                              # (tq,  C) bf16, pre-scaled
    k = k_ref[0]                                              # (tkv, C) bf16
    v = v_ref[0]                                              # (tkv, C) bf16

    # scores: contract last dims of q and k directly (no explicit k.T relayout)
    s = jax.lax.dot_general(q, k, (((1,), (1,)), ((), ())),
                            preferred_element_type=jnp.float32)        # (tq, tkv)

    m_prev = m_sc[...]
    m_new = jnp.maximum(m_prev, jnp.max(s, axis=-1, keepdims=True))
    alpha = jnp.exp(m_prev - m_new)
    p = jnp.exp(s - m_new)                                    # unnormalized probs, f32
    l_sc[...] = alpha * l_sc[...] + jnp.sum(p, axis=-1, keepdims=True)
    acc_sc[...] = alpha * acc_sc[...] + jnp.dot(
        p.astype(jnp.bfloat16), v, preferred_element_type=jnp.float32)
    m_sc[...] = m_new

    @pl.when(kv == pl.num_programs(2) - 1)
    def _finalize():
        ctx = acc_sc[...] * pl.reciprocal(l_sc[...], approx=True)      # (tq, C)
        out = jnp.dot(ctx.astype(jnp.bfloat16), wot_ref[...],
                      preferred_element_type=jnp.float32) + bo_ref[...]
        o_ref[0] = (x_ref[0].astype(jnp.float32) + out).astype(o_ref.dtype)


# --------------------------------------------------------------------------- #
# Wrapper
# --------------------------------------------------------------------------- #
def _pick_tile(size, target):
    """Largest tile <= target that divides `size` (multiple of 8 when tiled)."""
    if size <= target:
        return size
    t = target
    while t >= 8:
        if size % t == 0:
            return t
        t //= 2
    # TODO(synk): pad S to a tile multiple and mask instead of falling back untiled.
    return size


def _vmem_limit_bytes(block_bytes):
    """Generation-aware VMEM budget: ~75% of capacity (v7x ~48 MiB, v5e/v6e ~96 MiB)."""
    try:
        cap = int(getattr(pltpu.get_tpu_info(), "vmem_capacity_bytes", 64 << 20))
    except Exception:
        cap = 64 << 20
    hi = (cap * 3) // 4                      # headroom for Mosaic internal scratch
    need = 2 * int(block_bytes) + (4 << 20)  # double-buffering + slack
    lo = min(32 << 20, hi)
    return int(min(max(need, lo), hi))


def attn_block(x, params, *, num_groups=32, eps=1e-5,
               ts_target=1024, tq_target=1024, tkv_target=1024):
    B, C, H, W = x.shape
    S = H * W
    G = num_groups
    assert C % G == 0

    x_seq = jnp.transpose(x.reshape(B, C, S), (0, 2, 1)).astype(jnp.float32)  # (B,S,C)

    # ---- host-side parameter prep ----
    n_per_group = float(S * (C // G))
    gid = jnp.arange(C) // (C // G)
    avg_mat = (gid[:, None] == gid[None, :]).astype(jnp.float32) / n_per_group  # (C,C)

    gamma = params["gamma"].reshape(1, C).astype(jnp.float32)
    beta = params["beta"].reshape(1, C).astype(jnp.float32)
    wq, wk, wv = jnp.split(params["in_proj_weight"], 3, axis=0)
    bq, _bk, bv = jnp.split(params["in_proj_bias"], 3, axis=0)   # k bias dropped
    scale = 1.0 / math.sqrt(C)
    wqkv_t = jnp.concatenate([wq.T * scale, wk.T, wv.T], axis=1).astype(jnp.bfloat16)
    bqkv = jnp.concatenate([bq * scale, jnp.zeros_like(bq), bv]
                           ).reshape(1, 3 * C).astype(jnp.float32)
    wot = params["out_proj_weight"].T.astype(jnp.bfloat16)
    bo = params["out_proj_bias"].reshape(1, C).astype(jnp.float32)

    ts = _pick_tile(S, ts_target)
    nt = S // ts

    # ---- kernel A: GroupNorm stats ----
    kA_bytes = ts * C * 4 + C * C * 4 + 4 * C * 4 + 2 * C * 4 + 2 * 8 * C * 4
    scale_b, shift_b = pl.pallas_call(
        functools.partial(gn_stats_kernel, eps=eps),
        out_shape=(jax.ShapeDtypeStruct((B, 1, C), jnp.float32),
                   jax.ShapeDtypeStruct((B, 1, C), jnp.float32)),
        grid_spec=pltpu.PrefetchScalarGridSpec(
            num_scalar_prefetch=0,
            grid=(B, nt),
            in_specs=[
                pl.BlockSpec((1, ts, C), lambda b, t: (b, t, 0)),   # x tile
                pl.BlockSpec((C, C), lambda b, t: (0, 0)),          # group-avg matrix
                pl.BlockSpec((1, C), lambda b, t: (0, 0)),          # gamma
                pl.BlockSpec((1, C), lambda b, t: (0, 0)),          # beta
            ],
            out_specs=[
                pl.BlockSpec((1, 1, C), lambda b, t: (b, 0, 0)),    # scale
                pl.BlockSpec((1, 1, C), lambda b, t: (b, 0, 0)),    # shift
            ],
            scratch_shapes=[pltpu.VMEM((1, C), jnp.float32),
                            pltpu.VMEM((1, C), jnp.float32)],
        ),
        compiler_params=pltpu.CompilerParams(
            dimension_semantics=("parallel", "arbitrary"),
            vmem_limit_bytes=_vmem_limit_bytes(kA_bytes)),
    )(x_seq, avg_mat, gamma, beta)

    # ---- kernel B: normalize + fused QKV projection ----
    kB_bytes = (ts * C * 4 + 2 * C * 4 + C * 3 * C * 2 + 3 * C * 4
                + 3 * ts * C * 2                        # q/k/v out tiles (bf16)
                + ts * C * 2 + ts * 3 * C * 4 + ts * 3 * C * 2)   # h / qkv temporaries
    qkv_shape = jax.ShapeDtypeStruct((B, S, C), jnp.bfloat16)
    q, k, v = pl.pallas_call(
        functools.partial(norm_qkv_kernel, C=C),
        out_shape=(qkv_shape, qkv_shape, qkv_shape),
        grid_spec=pltpu.PrefetchScalarGridSpec(
            num_scalar_prefetch=0,
            grid=(B, nt),
            in_specs=[
                pl.BlockSpec((1, ts, C), lambda b, t: (b, t, 0)),   # x tile
                pl.BlockSpec((1, 1, C), lambda b, t: (b, 0, 0)),    # scale
                pl.BlockSpec((1, 1, C), lambda b, t: (b, 0, 0)),    # shift
                pl.BlockSpec((C, 3 * C), lambda b, t: (0, 0)),      # fused Wqkv^T
                pl.BlockSpec((1, 3 * C), lambda b, t: (0, 0)),      # fused bias
            ],
            out_specs=[
                pl.BlockSpec((1, ts, C), lambda b, t: (b, t, 0)),
                pl.BlockSpec((1, ts, C), lambda b, t: (b, t, 0)),
                pl.BlockSpec((1, ts, C), lambda b, t: (b, t, 0)),
            ],
        ),
        compiler_params=pltpu.CompilerParams(
            dimension_semantics=("parallel", "parallel"),
            vmem_limit_bytes=_vmem_limit_bytes(kB_bytes)),
    )(x_seq, scale_b, shift_b, wqkv_t, bqkv)

    # ---- kernel C: flash attention + out-proj + residual ----
    tq = _pick_tile(S, tq_target)
    tkv = _pick_tile(S, tkv_target)
    nq, nkv = S // tq, S // tkv
    kC_bytes = (tq * C * 2 + 2 * tkv * C * 2 + tq * C * 4 + C * C * 2 + C * 4
                + tq * C * 2                        # output tile
                + tq * (C + 2) * 4                  # scratch m/l/acc
                + tq * tkv * 4 + tq * tkv * 2       # score f32 / prob bf16 temporaries
                + tq * C * 4)                       # p@v result temporary

    out_seq = pl.pallas_call(
        flash_attn_kernel,
        out_shape=jax.ShapeDtypeStruct((B, S, C), x.dtype),
        grid_spec=pltpu.PrefetchScalarGridSpec(
            num_scalar_prefetch=0,
            grid=(B, nq, nkv),
            in_specs=[
                pl.BlockSpec((1, tq, C), lambda b, qi, ki: (b, qi, 0)),   # q
                pl.BlockSpec((1, tkv, C), lambda b, qi, ki: (b, ki, 0)),  # k
                pl.BlockSpec((1, tkv, C), lambda b, qi, ki: (b, ki, 0)),  # v
                pl.BlockSpec((1, tq, C), lambda b, qi, ki: (b, qi, 0)),   # x (residual)
                pl.BlockSpec((C, C), lambda b, qi, ki: (0, 0)),           # Wo^T
                pl.BlockSpec((1, C), lambda b, qi, ki: (0, 0)),           # bo
            ],
            out_specs=pl.BlockSpec((1, tq, C), lambda b, qi, ki: (b, qi, 0)),
            scratch_shapes=[
                pltpu.VMEM((tq, 1), jnp.float32),   # running max m
                pltpu.VMEM((tq, 1), jnp.float32),   # running sum l
                pltpu.VMEM((tq, C), jnp.float32),   # output accumulator
            ],
        ),
        compiler_params=pltpu.CompilerParams(
            dimension_semantics=("parallel", "parallel", "arbitrary"),
            vmem_limit_bytes=_vmem_limit_bytes(kC_bytes)),
    )(q, k, v, x_seq, wot, bo)

    return jnp.transpose(out_seq, (0, 2, 1)).reshape(B, C, H, W)


# --------------------------------------------------------------------------- #
# Pure-JAX reference matching the PyTorch forward
# --------------------------------------------------------------------------- #
def attn_block_ref(x, params, num_groups=32, eps=1e-5):
    B, C, H, W = x.shape
    G = num_groups
    xg = x.reshape(B, G, C // G, H, W)
    mean = xg.mean(axis=(2, 3, 4), keepdims=True)
    var = xg.var(axis=(2, 3, 4), keepdims=True)
    hn = ((xg - mean) / jnp.sqrt(var + eps)).reshape(B, C, H, W)
    hn = hn * params["gamma"][None, :, None, None] + params["beta"][None, :, None, None]
    h = jnp.transpose(hn.reshape(B, C, H * W), (0, 2, 1))   # (B, S, C)
    wq, wk, wv = jnp.split(params["in_proj_weight"], 3, axis=0)
    bq, bk, bv = jnp.split(params["in_proj_bias"], 3, axis=0)
    q = h @ wq.T + bq
    k = h @ wk.T + bk
    v = h @ wv.T + bv
    s = jnp.einsum("bqc,bkc->bqk", q, k) / jnp.sqrt(jnp.float32(C))
    a = jax.nn.softmax(s, axis=-1)
    ctx = jnp.einsum("bqk,bkc->bqc", a, v)
    out = ctx @ params["out_proj_weight"].T + params["out_proj_bias"]
    out = jnp.transpose(out, (0, 2, 1)).reshape(B, C, H, W)
    return x + out


if __name__ == "__main__":
    # in_c must be a multiple of 32 (GroupNorm(32, in_c)); keep shapes small.
    B, C, H, W = 2, 32, 8, 8
    key = jax.random.PRNGKey(0)
    ks = jax.random.split(key, 7)
    x = jax.random.normal(ks[0], (B, C, H, W), jnp.float32)
    params = {
        "gamma": 1.0 + 0.1 * jax.random.normal(ks[1], (C,), jnp.float32),
        "beta": 0.1 * jax.random.normal(ks[2], (C,), jnp.float32),
        "in_proj_weight": 0.2 * jax.random.normal(ks[3], (3 * C, C), jnp.float32),
        "in_proj_bias": 0.05 * jax.random.normal(ks[4], (3 * C,), jnp.float32),
        "out_proj_weight": 0.2 * jax.random.normal(ks[5], (C, C), jnp.float32),
        "out_proj_bias": 0.05 * jax.random.normal(ks[6], (C,), jnp.float32),
    }

    out = attn_block(x, params)
    jax.block_until_ready(out)

    # Tolerance reflects bf16 MXU operands (f32 accumulation) vs. the f32 reference.
    ref = attn_block_ref(x, params)
    np.testing.assert_allclose(np.asarray(out), np.asarray(ref), rtol=5e-2, atol=1e-1)
    print("KERNEL_OK")
</pallas_src>

<mosaic_0001>
module attributes {stable_mosaic.version = 11 : i64} {
  func.func @gn_stats_kernel(%arg0: i32, %arg1: i32, %arg2: memref<1x64x32xf32, #tpu.memory_space<vmem>>, %arg3: memref<32x32xf32, #tpu.memory_space<vmem>>, %arg4: memref<1x32xf32, #tpu.memory_space<vmem>>, %arg5: memref<1x32xf32, #tpu.memory_space<vmem>>, %arg6: memref<1x1x32xf32, #tpu.memory_space<vmem>>, %arg7: memref<1x1x32xf32, #tpu.memory_space<vmem>>, %arg8: memref<1x32xf32, #tpu.memory_space<vmem>>, %arg9: memref<1x32xf32, #tpu.memory_space<vmem>>) attributes {dimension_semantics = [#tpu.dimension_semantics<parallel>, #tpu.dimension_semantics<arbitrary>], iteration_bounds = array<i64: 2, 1>, scalar_prefetch = 0 : i64, scratch_operands = 2 : i64, tpu.core_type = #tpu.core_type<tc>, window_params = [{transform_indices = @transform_0, window_bounds = array<i64: 1, 64, 32>}, {pipeline_mode = #tpu.pipeline_mode<synchronous>, transform_indices = @transform_1, window_bounds = array<i64: 32, 32>}, {pipeline_mode = #tpu.pipeline_mode<synchronous>, transform_indices = @transform_2, window_bounds = array<i64: 1, 32>}, {pipeline_mode = #tpu.pipeline_mode<synchronous>, transform_indices = @transform_3, window_bounds = array<i64: 1, 32>}, {transform_indices = @transform_4, window_bounds = array<i64: 1, 1, 32>}, {transform_indices = @transform_5, window_bounds = array<i64: 1, 1, 32>}]} {
    %c0_i32 = arith.constant 0 : i32
    %0 = arith.cmpi eq, %arg1, %c0_i32 : i32
    %1 = arith.extui %0 : i1 to i32
    %c0_i32_0 = arith.constant 0 : i32
    %2 = arith.cmpi ne, %1, %c0_i32_0 : i32
    scf.if %2 {
      %cst_14 = arith.constant 0.000000e+00 : f32
      %19 = vector.broadcast %cst_14 : f32 to vector<1x32xf32>
      %c0_15 = arith.constant 0 : index
      %c0_16 = arith.constant 0 : index
      %20 = vector.load %arg8[%c0_15, %c0_16] : memref<1x32xf32, #tpu.memory_space<vmem>>, vector<1x32xf32>
      tpu.vector_store %arg8[%c0_15, %c0_16], %19 {strides = array<i32>} : memref<1x32xf32, #tpu.memory_space<vmem>>, vector<1x32xf32>,
      %cst_17 = arith.constant 0.000000e+00 : f32
      %21 = vector.broadcast %cst_17 : f32 to vector<1x32xf32>
      %c0_18 = arith.constant 0 : index
      %c0_19 = arith.constant 0 : index
      %22 = vector.load %arg9[%c0_18, %c0_19] : memref<1x32xf32, #tpu.memory_space<vmem>>, vector<1x32xf32>
      tpu.vector_store %arg9[%c0_18, %c0_19], %21 {strides = array<i32>} : memref<1x32xf32, #tpu.memory_space<vmem>>, vector<1x32xf32>,
    } else {
    }
    %c0 = arith.constant 0 : index
    %c0_1 = arith.constant 0 : index
    %c0_2 = arith.constant 0 : index
    %3 = vector.load %arg2[%c0, %c0_1, %c0_2] : memref<1x64x32xf32, #tpu.memory_space<vmem>>, vector<1x64x32xf32>
    %4 = vector.shape_cast %3 : vector<1x64x32xf32> to vector<64x32xf32>
    %c0_3 = arith.constant 0 : index
    %c0_4 = arith.constant 0 : index
    %5 = vector.load %arg8[%c0_3, %c0_4] : memref<1x32xf32, #tpu.memory_space<vmem>>, vector<1x32xf32>
    %cst = arith.constant dense<0.000000e+00> : vector<32xf32>
    %6 = vector.multi_reduction <add>, %4, %cst [0] : vector<64x32xf32> to vector<32xf32>
    %7 = vector.shape_cast %6 : vector<32xf32> to vector<1x32xf32>
    %8 = arith.addf %5, %7 : vector<1x32xf32>
    %c0_5 = arith.constant 0 : index
    %c0_6 = arith.constant 0 : index
    %9 = vector.load %arg8[%c0_5, %c0_6] : memref<1x32xf32, #tpu.memory_space<vmem>>, vector<1x32xf32>
    tpu.vector_store %arg8[%c0_5, %c0_6], %8 {strides = array<i32>} : memref<1x32xf32, #tpu.memory_space<vmem>>, vector<1x32xf32>,
    %c0_7 = arith.constant 0 : index
    %c0_8 = arith.constant 0 : index
    %10 = vector.load %arg9[%c0_7, %c0_8] : memref<1x32xf32, #tpu.memory_space<vmem>>, vector<1x32xf32>
    %11 = arith.mulf %4, %4 : vector<64x32xf32>
    %cst_9 = arith.constant dense<0.000000e+00> : vector<32xf32>
    %12 = vector.multi_reduction <add>, %11, %cst_9 [0] : vector<64x32xf32> to vector<32xf32>
    %13 = vector.shape_cast %12 : vector<32xf32> to vector<1x32xf32>
    %14 = arith.addf %10, %13 : vector<1x32xf32>
    %c0_10 = arith.constant 0 : index
    %c0_11 = arith.constant 0 : index
    %15 = vector.load %arg9[%c0_10, %c0_11] : memref<1x32xf32, #tpu.memory_space<vmem>>, vector<1x32xf32>
    tpu.vector_store %arg9[%c0_10, %c0_11], %14 {strides = array<i32>} : memref<1x32xf32, #tpu.memory_space<vmem>>, vector<1x32xf32>,
    %c0_i32_12 = arith.constant 0 : i32
    %16 = arith.cmpi eq, %arg1, %c0_i32_12 : i32
    %17 = arith.extui %16 : i1 to i32
    %c0_i32_13 = arith.constant 0 : i32
    %18 = arith.cmpi ne, %17, %c0_i32_13 : i32
    scf.if %18 {
      %c0_14 = arith.constant 0 : index
      %c0_15 = arith.constant 0 : index
      %19 = vector.load %arg8[%c0_14, %c0_15] : memref<1x32xf32, #tpu.memory_space<vmem>>, vector<1x32xf32>
      %c0_16 = arith.constant 0 : index
      %c0_17 = arith.constant 0 : index
      %20 = vector.load %arg3[%c0_16, %c0_17] : memref<32x32xf32, #tpu.memory_space<vmem>>, vector<32x32xf32>
      %cst_18 = arith.constant dense<0.000000e+00> : vector<1x32xf32>
      %21 = tpu.matmul %19, %20, %cst_18 {dimension_numbers = #tpu.dot_dimension_numbers<[1], [0], [0], [1], [0, 0, 1, 1], [], []>} : vector<1x32xf32>, vector<32x32xf32>, vector<1x32xf32> -> vector<1x32xf32>
      %c0_19 = arith.constant 0 : index
      %c0_20 = arith.constant 0 : index
      %22 = vector.load %arg9[%c0_19, %c0_20] : memref<1x32xf32, #tpu.memory_space<vmem>>, vector<1x32xf32>
      %c0_21 = arith.constant 0 : index
      %c0_22 = arith.constant 0 : index
      %23 = vector.load %arg3[%c0_21, %c0_22] : memref<32x32xf32, #tpu.memory_space<vmem>>, vector<32x32xf32>
      %cst_23 = arith.constant dense<0.000000e+00> : vector<1x32xf32>
      %24 = tpu.matmul %22, %23, %cst_23 {dimension_numbers = #tpu.dot_dimension_numbers<[1], [0], [0], [1], [0, 0, 1, 1], [], []>} : vector<1x32xf32>, vector<32x32xf32>, vector<1x32xf32> -> vector<1x32xf32>
      %25 = arith.mulf %21, %21 : vector<1x32xf32>
      %26 = arith.subf %24, %25 : vector<1x32xf32>
      %cst_24 = arith.constant 0.000000e+00 : f32
      %27 = vector.broadcast %cst_24 : f32 to vector<1x32xf32>
      %28 = arith.maximumf %26, %27 : vector<1x32xf32>
      %cst_25 = arith.constant 9.99999974E-6 : f32
      %29 = vector.broadcast %cst_25 : f32 to vector<1x32xf32>
      %30 = arith.addf %28, %29 : vector<1x32xf32>
      %31 = math.rsqrt %30 : vector<1x32xf32>
      %c0_26 = arith.constant 0 : index
      %c0_27 = arith.constant 0 : index
      %32 = vector.load %arg4[%c0_26, %c0_27] : memref<1x32xf32, #tpu.memory_space<vmem>>, vector<1x32xf32>
      %33 = arith.mulf %31, %32 : vector<1x32xf32>
      %c0_28 = arith.constant 0 : index
      %c0_29 = arith.constant 0 : index
      %c0_30 = arith.constant 0 : index
      %34 = vector.load %arg6[%c0_28, %c0_29, %c0_30] : memref<1x1x32xf32, #tpu.memory_space<vmem>>, vector<1x1x32xf32>
      %35 = vector.shape_cast %34 : vector<1x1x32xf32> to vector<1x32xf32>
      %36 = vector.shape_cast %33 : vector<1x32xf32> to vector<1x1x32xf32>
      tpu.vector_store %arg6[%c0_28, %c0_29, %c0_30], %36 {strides = array<i32>} : memref<1x1x32xf32, #tpu.memory_space<vmem>>, vector<1x1x32xf32>,
      %c0_31 = arith.constant 0 : index
      %c0_32 = arith.constant 0 : index
      %37 = vector.load %arg5[%c0_31, %c0_32] : memref<1x32xf32, #tpu.memory_space<vmem>>, vector<1x32xf32>
      %38 = arith.mulf %21, %33 : vector<1x32xf32>
      %39 = arith.subf %37, %38 : vector<1x32xf32>
      %c0_33 = arith.constant 0 : index
      %c0_34 = arith.constant 0 : index
      %c0_35 = arith.constant 0 : index
      %40 = vector.load %arg7[%c0_33, %c0_34, %c0_35] : memref<1x1x32xf32, #tpu.memory_space<vmem>>, vector<1x1x32xf32>
      %41 = vector.shape_cast %40 : vector<1x1x32xf32> to vector<1x32xf32>
      %42 = vector.shape_cast %39 : vector<1x32xf32> to vector<1x1x32xf32>
      tpu.vector_store %arg7[%c0_33, %c0_34, %c0_35], %42 {strides = array<i32>} : memref<1x1x32xf32, #tpu.memory_space<vmem>>, vector<1x1x32xf32>,
    } else {
    }
    return
  }
  func.func @transform_0(%arg0: i32, %arg1: i32) -> (i32, i32, i32) {
    %c0_i32 = arith.constant 0 : i32
    %c0_i32_0 = arith.constant 0 : i32
    return %arg0, %arg1, %c0_i32 : i32, i32, i32
  }
  func.func @transform_1(%arg0: i32, %arg1: i32) -> (i32, i32) {
    %c0_i32 = arith.constant 0 : i32
    %c0_i32_0 = arith.constant 0 : i32
    %c0_i32_1 = arith.constant 0 : i32
    return %c0_i32, %c0_i32_0 : i32, i32
  }
  func.func @transform_2(%arg0: i32, %arg1: i32) -> (i32, i32) {
    %c0_i32 = arith.constant 0 : i32
    %c0_i32_0 = arith.constant 0 : i32
    %c0_i32_1 = arith.constant 0 : i32
    return %c0_i32, %c0_i32_0 : i32, i32
  }
  func.func @transform_3(%arg0: i32, %arg1: i32) -> (i32, i32) {
    %c0_i32 = arith.constant 0 : i32
    %c0_i32_0 = arith.constant 0 : i32
    %c0_i32_1 = arith.constant 0 : i32
    return %c0_i32, %c0_i32_0 : i32, i32
  }
  func.func @transform_4(%arg0: i32, %arg1: i32) -> (i32, i32, i32) {
    %c0_i32 = arith.constant 0 : i32
    %c0_i32_0 = arith.constant 0 : i32
    %c0_i32_1 = arith.constant 0 : i32
    return %arg0, %c0_i32, %c0_i32_0 : i32, i32, i32
  }
  func.func @transform_5(%arg0: i32, %arg1: i32) -> (i32, i32, i32) {
    %c0_i32 = arith.constant 0 : i32
    %c0_i32_0 = arith.constant 0 : i32
    %c0_i32_1 = arith.constant 0 : i32
    return %arg0, %c0_i32, %c0_i32_0 : i32, i32, i32
  }
}

</mosaic_0001>

<llo_original>
// kernel: tpu_custom_call.1
$region0: #{tpu_custom_call.1}
  #allocation0 [shape = 'u32[]', space=smem, size = 0x4, offset = 0x4, fixed_abs, tag = 'smem constant byte address 0x4 - core index']
  #allocation1 [shape = 'u32[144,128]{1,0:T(1,128)}', space=vmem, size = 0x12000, scoped, tag = 'internal scratch']
  #allocation2 [shape = 'f32[1,32]{1,0:T(1,128)}', space=vmem, size = 0x200, scoped, tag = 'scratch operand']
  #allocation3 [shape = 'f32[1,32]{1,0:T(1,128)}', space=vmem, size = 0x200, scoped, tag = 'scratch operand']
  %s0 = inlined_call_operand.vmem [shape: f32[2,64,32], index: 0, kind: input, shape index: {}]
  %s1 = inlined_call_operand.vmem [shape: f32[32,32], index: 1, kind: input, shape index: {}]
  %s2 = inlined_call_operand.vmem [shape: f32[1,32], index: 2, kind: input, shape index: {}]
  %s3 = inlined_call_operand.vmem [shape: f32[1,32], index: 3, kind: input, shape index: {}]
  %s4 = inlined_call_operand.hbm [shape: f32[2,1,32], index: 4, kind: output, shape index: {0}]
  %s5 = inlined_call_operand.hbm [shape: f32[2,1,32], index: 5, kind: output, shape index: {1}]
  %6 = xla_tuple %s4, %s5
  %s7 = sld [smem:[#allocation0]]
  $region65: #{tpu_custom_call.1} parent=0
    _
  %s9 = ssub.s32 1, %s7
  %s10 = scalar_select 0, %s9, %s7
  $region1: #{tpu_custom_call.1} parent=0
    #allocation4 [shape = 'u8[1024]{0}', space=vmem, size = 0x400, scoped, tag = 'output window, operand 0']
    #allocation5 [shape = 's32[2]{0}', space=sflag, size = 0x8, scoped, tag = 'scoped memory for tpu_custom_call.1']
    #allocation6 [shape = 'u8[1024]{0}', space=vmem, size = 0x400, scoped, tag = 'output window, operand 1']
    #allocation7 [shape = 's32[2]{0}', space=sflag, size = 0x8, scoped, tag = 'scoped memory for tpu_custom_call.1']
    %11 = vsyncpa [#allocation5], 0
    %s12 = scalar_lea.sflag [#allocation5], 1
    %13 = vsyncpa %s12, 0
    %14 = vsyncpa [#allocation7], 0
    %s15 = scalar_lea.sflag [#allocation7], 1
    %16 = vsyncpa %s15, 0
    loop: start=0, step=1, limit=4
    $region2: #{tpu_custom_call.1} parent=1 // loop_pre_header
      _
    $region3: #{tpu_custom_call.1} parent=1 // loop_header
      %s18 = sphi 0, %s22
      %p19 = scmp.ge.s32.totalorder %s18, 4
      %s25 = sphi 0, %s37
      %s26 = sphi 0, %s33
      %s27 = sphi 0, %s25
      %s28 = sphi 0, %s26
      %s29 = sphi 0, %s27
      %s30 = sphi 0, %s28
      %s42 = sphi 0, %s44
      %s45 = sphi 0, %s42
      %s46 = sphi 0, %s45
      %s62 = sphi 0, %s46
      %s66 = sphi 0, %s66
      %s68 = sphi 0, %s66
      %s69 = sphi 0, %s68
      %s83 = sphi 0, %s69
      %s87 = sphi 0, %s87
      %s89 = sphi 0, %s87
      %s90 = sphi 0, %s89
      %s104 = sphi 0, %s90
      %s108 = sphi 0, %s108
      %s110 = sphi 0, %s108
      %s111 = sphi 0, %s110
      %s125 = sphi 0, %s111
      %s131 = sphi 0, %s133
      %s134 = sphi 0, %s131
      %s135 = sphi 0, %s134
      %s151 = sphi 0, %s135
      %s157 = sphi 0, %s159
      %s160 = sphi 0, %s157
      %s161 = sphi 0, %s160
      %s177 = sphi 0, %s161
    $region4: #{tpu_custom_call.1} parent=1 // loop_header_branch
      %21 = sbr.rel (%p19) target = $region8
    $region5: #{tpu_custom_call.1} parent=1 // loop_body
      %s23 = ssub.s32 %s18, 1
      %s24 = ssub.s32 %s18, 2
      %s31 = sadd.s32 1, %s26
      %p32 = scmp.ge.s32.totalorder %s31, 1
      %s33 = scalar_select %p32, 0, %s31
      %s34 = sadd.s32 1, %s25
      %s35 = scalar_select %p32, %s34, %s25
      %p36 = scmp.ge.s32.totalorder %s35, 2
      %s37 = scalar_select %p36, 0, %s35
      %s38 = ssub.s32 %s25, %s37
      %s39 = ssub.s32 %s26, %s33
      %s40 = sor.u32 %s38, %s39
      %p41 = scmp.eq.s32.totalorder %s40, 0
      %s43 = sadd.s32 %s42, 1
      %s44 = scalar_select %p41, %s42, %s43
      %p47 = pneg %p41
      %p48 = scmp.eq.s32.totalorder %s18, 1
      %p49 = por %p47, %p48
      %p50 = scmp.ne.s32.totalorder %s42, %s45
      %p51 = scmp.eq.s32.totalorder %s18, 0
      %p52 = por %p50, %p51
      %p53 = scmp.ne.s32.totalorder %s42, %s45
      %p54 = scmp.eq.s32.totalorder %s23, 1
      %p55 = por %p53, %p54
      %p56 = scmp.ne.s32.totalorder %s45, %s46
      %p57 = scmp.eq.s32.totalorder %s23, 0
      %p58 = por %p56, %p57
      %p59 = scmp.ne.s32.totalorder %s45, %s46
      %p60 = scmp.eq.s32.totalorder %s24, 1
      %p61 = por %p59, %p60
      %p63 = scmp.ne.s32.totalorder %s46, %s62
      %p64 = scmp.eq.s32.totalorder %s24, 0
      %p65 = por %p63, %p64
      %s67 = sadd.s32 %s66, 1
      %p70 = scmp.eq.s32.totalorder %s18, 1
      %p71 = scmp.ne.s32.totalorder %s66, %s68
      %p72 = scmp.eq.s32.totalorder %s18, 0
      %p73 = por %p71, %p72
      %p74 = scmp.ne.s32.totalorder %s66, %s68
      %p75 = scmp.eq.s32.totalorder %s23, 1
      %p76 = por %p74, %p75
      %p77 = scmp.ne.s32.totalorder %s68, %s69
      %p78 = scmp.eq.s32.totalorder %s23, 0
      %p79 = por %p77, %p78
      %p80 = scmp.ne.s32.totalorder %s68, %s69
      %p81 = scmp.eq.s32.totalorder %s24, 1
      %p82 = por %p80, %p81
      %p84 = scmp.ne.s32.totalorder %s69, %s83
      %p85 = scmp.eq.s32.totalorder %s24, 0
      %p86 = por %p84, %p85
      %s88 = sadd.s32 %s87, 1
      %p91 = scmp.eq.s32.totalorder %s18, 1
      %p92 = scmp.ne.s32.totalorder %s87, %s89
      %p93 = scmp.eq.s32.totalorder %s18, 0
      %p94 = por %p92, %p93
      %p95 = scmp.ne.s32.totalorder %s87, %s89
      %p96 = scmp.eq.s32.totalorder %s23, 1
      %p97 = por %p95, %p96
      %p98 = scmp.ne.s32.totalorder %s89, %s90
      %p99 = scmp.eq.s32.totalorder %s23, 0
      %p100 = por %p98, %p99
      %p101 = scmp.ne.s32.totalorder %s89, %s90
      %p102 = scmp.eq.s32.totalorder %s24, 1
      %p103 = por %p101, %p102
      %p105 = scmp.ne.s32.totalorder %s90, %s104
      %p106 = scmp.eq.s32.totalorder %s24, 0
      %p107 = por %p105, %p106
      %s109 = sadd.s32 %s108, 1
      %p112 = scmp.eq.s32.totalorder %s18, 1
      %p113 = scmp.ne.s32.totalorder %s108, %s110
      %p114 = scmp.eq.s32.totalorder %s18, 0
      %p115 = por %p113, %p114
      %p116 = scmp.ne.s32.totalorder %s108, %s110
      %p117 = scmp.eq.s32.totalorder %s23, 1
      %p118 = por %p116, %p117
      %p119 = scmp.ne.s32.totalorder %s110, %s111
      %p120 = scmp.eq.s32.totalorder %s23, 0
      %p121 = por %p119, %p120
      %p122 = scmp.ne.s32.totalorder %s110, %s111
      %p123 = scmp.eq.s32.totalorder %s24, 1
      %p124 = por %p122, %p123
      %p126 = scmp.ne.s32.totalorder %s111, %s125
      %p127 = scmp.eq.s32.totalorder %s24, 0
      %p128 = por %p126, %p127
      %s129 = ssub.s32 %s25, %s37
      %p130 = scmp.eq.s32.totalorder %s129, 0
      %s132 = sadd.s32 %s131, 1
      %s133 = scalar_select %p130, %s131, %s132
      %p136 = pneg %p130
      %p137 = scmp.eq.s32.totalorder %s18, 1
      %p138 = por %p136, %p137
      %p139 = scmp.ne.s32.totalorder %s131, %s134
      %p140 = scmp.eq.s32.totalorder %s18, 0
      %p141 = por %p139, %p140
      %p142 = scmp.ne.s32.totalorder %s131, %s134
      %p143 = scmp.eq.s32.totalorder %s23, 1
      %p144 = por %p142, %p143
      %p145 = scmp.ne.s32.totalorder %s134, %s135
      %p146 = scmp.eq.s32.totalorder %s23, 0
      %p147 = por %p145, %p146
      %p148 = scmp.ne.s32.totalorder %s134, %s135
      %p149 = scmp.eq.s32.totalorder %s24, 1
      %p150 = por %p148, %p149
      %p152 = scmp.ne.s32.totalorder %s135, %s151
      %p153 = scmp.eq.s32.totalorder %s24, 0
      %p154 = por %p152, %p153
      %s155 = ssub.s32 %s25, %s37
      %p156 = scmp.eq.s32.totalorder %s155, 0
      %s158 = sadd.s32 %s157, 1
      %s159 = scalar_select %p156, %s157, %s158
      %p162 = pneg %p156
      %p163 = scmp.eq.s32.totalorder %s18, 1
      %p164 = por %p162, %p163
      %p165 = scmp.ne.s32.totalorder %s157, %s160
      %p166 = scmp.eq.s32.totalorder %s18, 0
      %p167 = por %p165, %p166
      %p168 = scmp.ne.s32.totalorder %s157, %s160
      %p169 = scmp.eq.s32.totalorder %s23, 1
      %p170 = por %p168, %p169
      %p171 = scmp.ne.s32.totalorder %s160, %s161
      %p172 = scmp.eq.s32.totalorder %s23, 0
      %p173 = por %p171, %p172
      %p174 = scmp.ne.s32.totalorder %s160, %s161
      %p175 = scmp.eq.s32.totalorder %s24, 1
      %p176 = por %p174, %p175
      %p178 = scmp.ne.s32.totalorder %s161, %s177
      %p179 = scmp.eq.s32.totalorder %s24, 0
      %p180 = por %p178, %p179
      %p181 = scmp.le.s32.totalorder 1, %s18
      %p182 = scmp.lt.s32.totalorder %s18, 3
      %p183 = pnand %p181, %p182
      %p184 = pneg %p183
      // Predicated region
      $region9: #{tpu_custom_call.1} parent=5 // pred_check
        _
      $region10: #{tpu_custom_call.1} parent=5 // pred_check_branch
        %186 = sbr.rel (%p183) target = $region12
      $region11: #{tpu_custom_call.1} parent=5 // pred_region
        %s187 = ssub.s32 %s18, 1
        // Predicated region
        $region13: #{tpu_custom_call.1} parent=11 // pred_check
          %p188 = pneg %p79
        $region14: #{tpu_custom_call.1} parent=11 // pred_check_branch
          %190 = sbr.rel (%p188) target = $region16
        $region15: #{tpu_custom_call.1} parent=11 // pred_region
          _
        $region16: #{tpu_custom_call.1} parent=11 // pred_fallthru
          _
        // Predicated region
        $region17: #{tpu_custom_call.1} parent=11 // pred_check
          %p191 = pneg %p100
        $region18: #{tpu_custom_call.1} parent=11 // pred_check_branch
          %193 = sbr.rel (%p191) target = $region20
        $region19: #{tpu_custom_call.1} parent=11 // pred_region
          _
        $region20: #{tpu_custom_call.1} parent=11 // pred_fallthru
          _
        // Predicated region
        $region21: #{tpu_custom_call.1} parent=11 // pred_check
          %p194 = pneg %p121
        $region22: #{tpu_custom_call.1} parent=11 // pred_check_branch
          %196 = sbr.rel (%p194) target = $region24
        $region23: #{tpu_custom_call.1} parent=11 // pred_region
          _
        $region24: #{tpu_custom_call.1} parent=11 // pred_fallthru
          _
      $region12: #{tpu_custom_call.1} parent=5 // pred_fallthru
        _
      %p197 = scmp.lt.s32.totalorder %s18, 2
      // Predicated region
      $region25: #{tpu_custom_call.1} parent=5 // pred_check
        %p198 = pneg %p197
      $region26: #{tpu_custom_call.1} parent=5 // pred_check_branch
        %200 = sbr.rel (%p198) target = $region28
      $region27: #{tpu_custom_call.1} parent=5 // pred_region
        // Predicated region
        $region29: #{tpu_custom_call.1} parent=27 // pred_check
          %p201 = pneg %p52
        $region30: #{tpu_custom_call.1} parent=27 // pred_check_branch
          %203 = sbr.rel (%p201) target = $region32
        $region31: #{tpu_custom_call.1} parent=27 // pred_region
          %s204 = smul.u32 8, %s26
          %p205 = scmp.lt.s32.totalorder %s25, 1
          %s206 = scalar_select %p205, %s25, 1
          %p207 = scmp.lt.s32.totalorder %s204, 7
          %s208 = scalar_select %p207, %s204, 7
          %s209 = smul.addr %s206, 8
          %s210 = sadd.s32 %s208, %s209
          %s211 = smul.addr %s210, 8
          %s212 = scalar_lea.vmem %s0, %s211
          %s213 = smul.u32 8, %s26
        $region32: #{tpu_custom_call.1} parent=27 // pred_fallthru
          _
      $region28: #{tpu_custom_call.1} parent=5 // pred_fallthru
        _
      %p214 = scmp.le.s32.totalorder 1, %s18
      %p215 = scmp.lt.s32.totalorder %s18, 3
      %p216 = pnand %p214, %p215
      %p217 = pneg %p216
      // Predicated region
      $region33: #{tpu_custom_call.1} parent=5 // pred_check
        _
      $region34: #{tpu_custom_call.1} parent=5 // pred_check_branch
        %219 = sbr.rel (%p216) target = $region36
      $region35: #{tpu_custom_call.1} parent=5 // pred_region
        %s220 = ssub.s32 %s18, 1
        %s221 = smul.u32 8, %s28
        %p222 = scmp.lt.s32.totalorder %s27, 1
        %s223 = scalar_select %p222, %s27, 1
        %p224 = scmp.lt.s32.totalorder %s221, 7
        %s225 = scalar_select %p224, %s221, 7
        %s226 = smul.addr %s223, 8
        %s227 = sadd.s32 %s225, %s226
        %s228 = smul.addr %s227, 8
        %s229 = scalar_lea.vmem %s0, %s228
        %p230 = pneg %p58
        %p231 = pneg %p55
        %p232 = pneg %p79
        %p233 = pneg %p76
        %p234 = pneg %p100
        %p235 = pneg %p97
        %p236 = pneg %p121
        %p237 = pneg %p118
        %p238 = pneg %p147
        %p239 = pneg %p144
        %s240 = sand.u32 %s134, 1
        %s241 = scalar_lea.sflag [#allocation5], %s240
        %s242 = sand.u32 %s134, 1
        %s243 = scalar_lea.vmem [#allocation4], %s242
        %p244 = pneg %p173
        %p245 = pneg %p170
        %s246 = sand.u32 %s160, 1
        %s247 = scalar_lea.sflag [#allocation7], %s246
        %s248 = sand.u32 %s160, 1
        %s249 = scalar_lea.vmem [#allocation6], %s248
        %s250 = smul.u32 8, %s28
        %p251 = scmp.lt.s32.totalorder %s27, 1
        %s252 = scalar_select %p251, %s27, 1
        %p253 = scmp.lt.s32.totalorder %s250, 7
        %s254 = scalar_select %p253, %s250, 7
        %s255 = smul.addr %s252, 8
        %s256 = sadd.s32 %s254, %s255
        %s257 = smul.addr %s256, 8
        %s258 = scalar_lea.vmem %s0, %s257
        %s259 = smul.u32 8, %s28
        %p260 = scmp.eq.s32.totalorder %s28, 0
        // Predicated region
        $region37: #{tpu_custom_call.1} parent=35 // pred_check
          %p261 = pneg %p260
        $region38: #{tpu_custom_call.1} parent=35 // pred_check_branch
          %263 = sbr.rel (%p261) target = $region40
        $region39: #{tpu_custom_call.1} parent=35 // pred_region
          %vm264 = vcmask 253952
          %265 = vst.msk [vmem:[#allocation2] sm:$0x1] %vm264, 0.0
          %266 = vst.msk [vmem:[#allocation3] sm:$0x1] %vm264, 0.0
        $region40: #{tpu_custom_call.1} parent=35 // pred_fallthru
          _
        %v267 = vld [vmem:[%s258] sm:$0xff]
        %v268 = vld [vmem:[%s258 + $0x8] sm:$0xff]
        %v269 = vld [vmem:[%s258 + $0x10] sm:$0xff]
        %v270 = vld [vmem:[%s258 + $0x18] sm:$0xff]
        %v271 = vld [vmem:[%s258 + $0x20] sm:$0xff]
        %v272 = vld [vmem:[%s258 + $0x28] sm:$0xff]
        %v273 = vld [vmem:[%s258 + $0x30] sm:$0xff]
        %v274 = vld [vmem:[%s258 + $0x38] sm:$0xff]
        %v275 = vld [vmem:[#allocation2] sm:$0x1]
        %vm276 = vcmask 261120
        %v277 = vsel %vm276, %v267, 0.0
        %v278 = vsel %vm276, %v268, 0.0
        %v279 = vadd.f32 %v277, %v278
        %v280 = vsel %vm276, %v269, 0.0
        %v281 = vadd.f32 %v279, %v280
        %v282 = vsel %vm276, %v270, 0.0
        %v283 = vadd.f32 %v281, %v282
        %v284 = vsel %vm276, %v271, 0.0
        %v285 = vadd.f32 %v283, %v284
        %v286 = vsel %vm276, %v272, 0.0
        %v287 = vadd.f32 %v285, %v286
        %v288 = vsel %vm276, %v273, 0.0
        %v289 = vadd.f32 %v287, %v288
        %v290 = vsel %vm276, %v274, 0.0
        %v291 = vadd.f32 %v289, %v290
        %v292 = vrot.slane %v291, 4
        %v293 = vadd.f32 %v291, %v292
        %v294 = vrot.slane %v293, 2
        %v295 = vadd.f32 %v293, %v294
        %v296 = vrot.slane %v295, 1
        %v297 = vadd.f32 %v295, %v296
        %v298 = vadd.f32 %v275, %v297
        %vm299 = vcmask 253952
        %300 = vst.msk [vmem:[#allocation2] sm:$0x1] %vm299, %v298
        %v301 = vld [vmem:[#allocation3] sm:$0x1]
        %v302 = vmul.f32 %v267, %v267
        %v303 = vmul.f32 %v268, %v268
        %v304 = vmul.f32 %v269, %v269
        %v305 = vmul.f32 %v270, %v270
        %v306 = vmul.f32 %v271, %v271
        %v307 = vmul.f32 %v272, %v272
        %v308 = vmul.f32 %v273, %v273
        %v309 = vmul.f32 %v274, %v274
        %v310 = vsel %vm276, %v302, 0.0
        %v311 = vsel %vm276, %v303, 0.0
        %v312 = vadd.f32 %v310, %v311
        %v313 = vsel %vm276, %v304, 0.0
        %v314 = vadd.f32 %v312, %v313
        %v315 = vsel %vm276, %v305, 0.0
        %v316 = vadd.f32 %v314, %v315
        %v317 = vsel %vm276, %v306, 0.0
        %v318 = vadd.f32 %v316, %v317
        %v319 = vsel %vm276, %v307, 0.0
        %v320 = vadd.f32 %v318, %v319
        %v321 = vsel %vm276, %v308, 0.0
        %v322 = vadd.f32 %v320, %v321
        %v323 = vsel %vm276, %v309, 0.0
        %v324 = vadd.f32 %v322, %v323
        %v325 = vrot.slane %v324, 4
        %v326 = vadd.f32 %v324, %v325
        %v327 = vrot.slane %v326, 2
        %v328 = vadd.f32 %v326, %v327
        %v329 = vrot.slane %v328, 1
        %v330 = vadd.f32 %v328, %v329
        %v331 = vadd.f32 %v301, %v330
        %332 = vst.msk [vmem:[#allocation3] sm:$0x1] %vm299, %v331
        // Predicated region
        $region41: #{tpu_custom_call.1} parent=35 // pred_check
          %p333 = pneg %p260
        $region42: #{tpu_custom_call.1} parent=35 // pred_check_branch
          %335 = sbr.rel (%p333) target = $region44
        $region43: #{tpu_custom_call.1} parent=35 // pred_region
          %v336 = vld [vmem:[#allocation2] sm:$0x1]
          %v337 = vld [vmem:[%s1] sm:$0xff]
          %v338 = vld [vmem:[%s1 + $0x8] sm:$0xff]
          %v339 = vld [vmem:[%s1 + $0x10] sm:$0xff]
          %v340 = vld [vmem:[%s1 + $0x18] sm:$0xff]
          %v342 = vsel %vm276, %v336, 0
          %344 = vmatprep.subr.mxu0 0.0
          %345 = vmatpush1.msra.mxu0 0.0
          %346 = vmatprep.subr.mxu0 0.0
          %347 = vmatpush1.msra.mxu0 0.0
          %348 = vmatprep.subr.mxu0 0.0
          %349 = vmatpush1.msra.mxu0 0.0
          %350 = vmatprep.subr.mxu0 0.0
          %351 = vmatpush1.msra.mxu0 0.0
          %352 = vmatprep.subr.mxu0 0.0
          %353 = vmatpush1.msra.mxu0 0.0
          %354 = vmatprep.subr.mxu0 0.0
          %355 = vmatpush1.msra.mxu0 0.0
          %356 = vmatprep.subr.mxu0 0.0
          %357 = vmatpush1.msra.mxu0 0.0
          %358 = vmatprep.subr.mxu0 0.0
          %359 = vmatpush1.msra.mxu0 0.0
          %360 = vmatprep.subr.mxu0 0.0
          %361 = vmatpush1.msra.mxu0 0.0
          %362 = vmatprep.subr.mxu0 0.0
          %363 = vmatpush1.msra.mxu0 0.0
          %364 = vmatprep.subr.mxu0 0.0
          %365 = vmatpush1.msra.mxu0 0.0
          %366 = vmatprep.subr.mxu0 0.0
          %367 = vmatpush1.msra.mxu0 0.0
          %368 = vmatprep.subr.mxu0 0.0
          %369 = vmatpush1.msra.mxu0 %v340
          %370 = vmatprep.subr.mxu0 0.0
          %371 = vmatpush1.msra.mxu0 %v339
          %372 = vmatprep.subr.mxu0 0.0
          %373 = vmatpush1.msra.mxu0 %v338
          %374 = vmatprep.subr.mxu0 0.0
          %375 = vmatpush1.msra.mxu0 %v337
          %376 = vmatprep.subr.mxu0 0.0
          %377 = vmatpush2.msra.mxu0 0.0
          %378 = vmatprep.subr.mxu0 0.0
          %379 = vmatpush2.msra.mxu0 0.0
          %380 = vmatprep.subr.mxu0 0.0
          %381 = vmatpush2.msra.mxu0 0.0
          %382 = vmatprep.subr.mxu0 0.0
          %383 = vmatpush2.msra.mxu0 0.0
          %384 = vmatprep.subr.mxu0 0.0
          %385 = vmatpush2.msra.mxu0 0.0
          %386 = vmatprep.subr.mxu0 0.0
          %387 = vmatpush2.msra.mxu0 0.0
          %388 = vmatprep.subr.mxu0 0.0
          %389 = vmatpush2.msra.mxu0 0.0
          %390 = vmatprep.subr.mxu0 0.0
          %391 = vmatpush2.msra.mxu0 0.0
          %392 = vmatprep.subr.mxu0 0.0
          %393 = vmatpush2.msra.mxu0 0.0
          %394 = vmatprep.subr.mxu0 0.0
          %395 = vmatpush2.msra.mxu0 0.0
          %396 = vmatprep.subr.mxu0 0.0
          %397 = vmatpush2.msra.mxu0 0.0
          %398 = vmatprep.subr.mxu0 0.0
          %399 = vmatpush2.msra.mxu0 0.0
          %400 = vmatprep.subr.mxu0 0.0
          %401 = vmatpush2.msra.mxu0 0.0
          %402 = vmatprep.subr.mxu0 0.0
          %403 = vmatpush2.msra.mxu0 0.0
          %404 = vmatprep.subr.mxu0 0.0
          %405 = vmatpush2.msra.mxu0 0.0
          %406 = vmatprep.subr.mxu0 0.0
          %407 = vmatpush2.msra.mxu0 0.0
          %408 = vmatprep.mubr.f32.mxu0 0.0
          %409 = vmatmul.mubr.f32.gmra.mxu0 %v342
          %v410 = vpop.f32.mrf.mxu0
          %v411 = vadd.f32 0.0, %v410
          %v412 = vpop.f32.mrf.mxu0
          %413 = vdwg.mxu0
          %v414 = vld [vmem:[#allocation3] sm:$0x1]
          %v416 = vsel %vm276, %v414, 0
          %418 = vmatprep.subr.mxu0 0.0
          %419 = vmatpush1.msra.mxu0 0.0
          %420 = vmatprep.subr.mxu0 0.0
          %421 = vmatpush1.msra.mxu0 0.0
          %422 = vmatprep.subr.mxu0 0.0
          %423 = vmatpush1.msra.mxu0 0.0
          %424 = vmatprep.subr.mxu0 0.0
          %425 = vmatpush1.msra.mxu0 0.0
          %426 = vmatprep.subr.mxu0 0.0
          %427 = vmatpush1.msra.mxu0 0.0
          %428 = vmatprep.subr.mxu0 0.0
          %429 = vmatpush1.msra.mxu0 0.0
          %430 = vmatprep.subr.mxu0 0.0
          %431 = vmatpush1.msra.mxu0 0.0
          %432 = vmatprep.subr.mxu0 0.0
          %433 = vmatpush1.msra.mxu0 0.0
          %434 = vmatprep.subr.mxu0 0.0
          %435 = vmatpush1.msra.mxu0 0.0
          %436 = vmatprep.subr.mxu0 0.0
          %437 = vmatpush1.msra.mxu0 0.0
          %438 = vmatprep.subr.mxu0 0.0
          %439 = vmatpush1.msra.mxu0 0.0
          %440 = vmatprep.subr.mxu0 0.0
          %441 = vmatpush1.msra.mxu0 0.0
          %442 = vmatprep.subr.mxu0 0.0
          %443 = vmatpush1.msra.mxu0 %v340
          %444 = vmatprep.subr.mxu0 0.0
          %445 = vmatpush1.msra.mxu0 %v339
          %446 = vmatprep.subr.mxu0 0.0
          %447 = vmatpush1.msra.mxu0 %v338
          %448 = vmatprep.subr.mxu0 0.0
          %449 = vmatpush1.msra.mxu0 %v337
          %450 = vmatprep.subr.mxu0 0.0
          %451 = vmatpush2.msra.mxu0 0.0
          %452 = vmatprep.subr.mxu0 0.0
          %453 = vmatpush2.msra.mxu0 0.0
          %454 = vmatprep.subr.mxu0 0.0
          %455 = vmatpush2.msra.mxu0 0.0
          %456 = vmatprep.subr.mxu0 0.0
          %457 = vmatpush2.msra.mxu0 0.0
          %458 = vmatprep.subr.mxu0 0.0
          %459 = vmatpush2.msra.mxu0 0.0
          %460 = vmatprep.subr.mxu0 0.0
          %461 = vmatpush2.msra.mxu0 0.0
          %462 = vmatprep.subr.mxu0 0.0
          %463 = vmatpush2.msra.mxu0 0.0
          %464 = vmatprep.subr.mxu0 0.0
          %465 = vmatpush2.msra.mxu0 0.0
          %466 = vmatprep.subr.mxu0 0.0
          %467 = vmatpush2.msra.mxu0 0.0
          %468 = vmatprep.subr.mxu0 0.0
          %469 = vmatpush2.msra.mxu0 0.0
          %470 = vmatprep.subr.mxu0 0.0
          %471 = vmatpush2.msra.mxu0 0.0
          %472 = vmatprep.subr.mxu0 0.0
          %473 = vmatpush2.msra.mxu0 0.0
          %474 = vmatprep.subr.mxu0 0.0
          %475 = vmatpush2.msra.mxu0 0.0
          %476 = vmatprep.subr.mxu0 0.0
          %477 = vmatpush2.msra.mxu0 0.0
          %478 = vmatprep.subr.mxu0 0.0
          %479 = vmatpush2.msra.mxu0 0.0
          %480 = vmatprep.subr.mxu0 0.0
          %481 = vmatpush2.msra.mxu0 0.0
          %482 = vmatprep.mubr.f32.mxu0 0.0
          %483 = vmatmul.mubr.f32.gmra.mxu0 %v416
          %v484 = vpop.f32.mrf.mxu0
          %v485 = vadd.f32 0.0, %v484
          %v486 = vpop.f32.mrf.mxu0
          %487 = vdwg.mxu0
          %v488 = vmul.f32 %v411, %v411
          %v489 = vsub.f32 %v485, %v488
          %v490 = vmax.f32 %v489, 0.0
          %v491 = vadd.f32 %v490, 1e-05
          %v492 = vrsqrt.pop %v491
          %v493 = vld [vmem:[%s2] sm:$0x1]
          %v494 = vmul.f32 %v492, %v493
          %495 = vst.msk [vmem:[%s243] sm:$0x1] %vm299, %v494
          %v496 = vld [vmem:[%s3] sm:$0x1]
          %v497 = vmul.f32 %v411, %v494
          %v498 = vsub.f32 %v496, %v497
          %499 = vst.msk [vmem:[%s249] sm:$0x1] %vm299, %v498
        $region44: #{tpu_custom_call.1} parent=35 // pred_fallthru
          _
        %s500 = sand.u32 %s134, 1
        %s501 = scalar_lea.sflag [#allocation5], %s500
        %s502 = sand.u32 %s134, 1
        %s503 = scalar_lea.vmem [#allocation4], %s502
        %s504 = sand.u32 %s160, 1
        %s505 = scalar_lea.sflag [#allocation7], %s504
        %s506 = sand.u32 %s160, 1
        %s507 = scalar_lea.vmem [#allocation6], %s506
        // Predicated region
        $region45: #{tpu_custom_call.1} parent=35 // pred_check
          %p508 = pneg %p144
        $region46: #{tpu_custom_call.1} parent=35 // pred_check_branch
          %510 = sbr.rel (%p508) target = $region48
        $region47: #{tpu_custom_call.1} parent=35 // pred_region
          %s512 = ssub.s32 16, 16
          %513 = vsyncadd %s501, %s512
          %s514 = smul.addr %s27, 16
          %s515 = scalar_lea.hbm %s4, %s514
          %s517 = sshll.u32 %s503, 4
          %s518 = int_to_ptr.vmem [resolvable:$true] %s517
          %520 = dma.vmem_to_hbm [thread:$0]  %s518, 16, %s515, %s501
        $region48: #{tpu_custom_call.1} parent=35 // pred_fallthru
          _
        // Predicated region
        $region49: #{tpu_custom_call.1} parent=35 // pred_check
          %p521 = pneg %p170
        $region50: #{tpu_custom_call.1} parent=35 // pred_check_branch
          %523 = sbr.rel (%p521) target = $region52
        $region51: #{tpu_custom_call.1} parent=35 // pred_region
          %s525 = ssub.s32 16, 16
          %526 = vsyncadd %s505, %s525
          %s527 = smul.addr %s27, 16
          %s528 = scalar_lea.hbm %s5, %s527
          %s530 = sshll.u32 %s507, 4
          %s531 = int_to_ptr.vmem [resolvable:$true] %s530
          %533 = dma.vmem_to_hbm [thread:$0]  %s531, 16, %s528, %s505
        $region52: #{tpu_custom_call.1} parent=35 // pred_fallthru
          _
      $region36: #{tpu_custom_call.1} parent=5 // pred_fallthru
        _
      %p534 = scmp.le.s32.totalorder 2, %s18
      // Predicated region
      $region53: #{tpu_custom_call.1} parent=5 // pred_check
        %p535 = pneg %p534
      $region54: #{tpu_custom_call.1} parent=5 // pred_check_branch
        %537 = sbr.rel (%p535) target = $region56
      $region55: #{tpu_custom_call.1} parent=5 // pred_region
        %s538 = ssub.s32 %s18, 2
        // Predicated region
        $region57: #{tpu_custom_call.1} parent=55 // pred_check
          %p539 = pneg %p150
        $region58: #{tpu_custom_call.1} parent=55 // pred_check_branch
          %541 = sbr.rel (%p539) target = $region60
        $region59: #{tpu_custom_call.1} parent=55 // pred_region
          %s542 = sand.u32 %s135, 1
          %s543 = scalar_lea.sflag [#allocation5], %s542
          %s544 = sand.u32 %s135, 1
          %s545 = scalar_lea.vmem [#allocation4], %s544
          %546 = dma.done %s543, 16
        $region60: #{tpu_custom_call.1} parent=55 // pred_fallthru
          _
        // Predicated region
        $region61: #{tpu_custom_call.1} parent=55 // pred_check
          %p547 = pneg %p176
        $region62: #{tpu_custom_call.1} parent=55 // pred_check_branch
          %549 = sbr.rel (%p547) target = $region64
        $region63: #{tpu_custom_call.1} parent=55 // pred_region
          %s550 = sand.u32 %s161, 1
          %s551 = scalar_lea.sflag [#allocation7], %s550
          %s552 = sand.u32 %s161, 1
          %s553 = scalar_lea.vmem [#allocation6], %s552
          %554 = dma.done %s551, 16
        $region64: #{tpu_custom_call.1} parent=55 // pred_fallthru
          _
      $region56: #{tpu_custom_call.1} parent=5 // pred_fallthru
        _
    $region6: #{tpu_custom_call.1} parent=1 // loop_footer
      %s22 = sadd.s32 1, %s18
    $region7: #{tpu_custom_call.1} parent=1 // loop_footer_branch
      %17 = sbr.rel target = $region3
    $region8: #{tpu_custom_call.1} parent=1 // loop_exit
      _
    %555 = vsyncpa [#allocation5], 1
    %s556 = scalar_lea.sflag [#allocation5], 1
    %557 = vsyncpa %s556, 1
    %558 = vsyncpa [#allocation7], 1
    %s559 = scalar_lea.sflag [#allocation7], 1
    %560 = vsyncpa %s559, 1

</llo_original>
